<compile_context>
chip_gen: v7x
topology: tpu7x:2x2x1
jax: 0.10.0
libtpu: 0.0.40
codegen_flags: <defaults>
</compile_context>

<pallas_src>
import functools

import jax
import jax.numpy as jnp
from jax.experimental import pallas as pl
from jax.experimental.pallas import tpu as pltpu


def _round_up(x, m):
    return ((x + m - 1) // m) * m


def _pick_tile(extent, candidates):
    return next(c for c in candidates if extent % c == 0)


# ----------------------------------------------------------------------------
# Kernels
# ----------------------------------------------------------------------------
def _equal_linear_kernel(x_ref, w_ref, b_ref, o_ref):
    # x_ref: (TM, K), w_ref: (TN, K), b_ref: (1, TN), o_ref: (TM, TN)
    acc = jax.lax.dot_general(
        x_ref[...],
        w_ref[...],
        dimension_numbers=(((1,), (1,)), ((), ())),  # contract in_dim on both
        preferred_element_type=jnp.float32,
    )
    o_ref[...] = (acc + b_ref[...].astype(jnp.float32)).astype(o_ref.dtype)


def _equal_linear_kernel_ktiled(x_ref, w_ref, b_ref, o_ref, acc_ref):
    # x_ref: (TM, TK), w_ref: (TN, TK), b_ref: (1, TN),
    # o_ref: (TM, TN), acc_ref: (TM, TN) f32 scratch.
    k = pl.program_id(2)
    part = jax.lax.dot_general(
        x_ref[...],
        w_ref[...],
        dimension_numbers=(((1,), (1,)), ((), ())),
        preferred_element_type=jnp.float32,
    )

    @pl.when(k == 0)
    def _init():
        acc_ref[...] = part

    @pl.when(k > 0)
    def _accum():
        acc_ref[...] += part

    @pl.when(k == pl.num_programs(2) - 1)
    def _finalize():
        o_ref[...] = (acc_ref[...] + b_ref[...].astype(jnp.float32)).astype(
            o_ref.dtype
        )


# ----------------------------------------------------------------------------
# Wrapper
# ----------------------------------------------------------------------------
@functools.partial(jax.jit, static_argnames=("max_single_k",))
def equal_linear(x, weight, bias, *, max_single_k=2048):
    """y = x @ weight.T + bias  (exact nn.Linear forward)."""
    B, in_dim = x.shape
    out_dim, in_dim_w = weight.shape
    assert in_dim == in_dim_w
    out_dtype = x.dtype

    # ---- pad to TPU-friendly shapes (zero padding is exact for a linear layer)
    Kp = _round_up(in_dim, 128)   # contraction dim (lane axis of x and W)
    Np = _round_up(out_dim, 128)  # output feature dim (lane axis of out)
    Bp = _round_up(B, 8)          # sublane axis of x / out

    TN = _pick_tile(Np, (512, 256, 128))
    TM = _pick_tile(Bp, (256, 128, 64, 32, 16, 8))

    x_p = jnp.pad(x, ((0, Bp - B), (0, Kp - in_dim)))
    w_p = jnp.pad(weight, ((0, Np - out_dim), (0, Kp - in_dim)))
    b_p = jnp.pad(bias, (0, Np - out_dim)).reshape(1, Np)

    dsize = jnp.dtype(out_dtype).itemsize
    cost = pl.CostEstimate(
        flops=2 * Bp * Kp * Np,
        bytes_accessed=(Bp * Kp + Np * Kp + Np + Bp * Np) * dsize,
        transcendentals=0,
    )

    if Kp <= max_single_k:
        # Single-shot K: W tile stays VMEM-resident across the (inner) batch axis.
        grid = (Np // TN, Bp // TM)
        out_p = pl.pallas_call(
            _equal_linear_kernel,
            out_shape=jax.ShapeDtypeStruct((Bp, Np), out_dtype),
            grid_spec=pltpu.PrefetchScalarGridSpec(
                num_scalar_prefetch=0,
                grid=grid,
                in_specs=[
                    pl.BlockSpec((TM, Kp), lambda j, i: (i, 0)),  # x tile
                    pl.BlockSpec((TN, Kp), lambda j, i: (j, 0)),  # W tile (resident over i)
                    pl.BlockSpec((1, TN), lambda j, i: (0, j)),   # bias tile
                ],
                out_specs=pl.BlockSpec((TM, TN), lambda j, i: (i, j)),
            ),
            compiler_params=pltpu.CompilerParams(
                dimension_semantics=("parallel", "parallel"),
            ),
            cost_estimate=cost,
        )(x_p, w_p, b_p)
    else:
        # K-tiled path: bounded VMEM for large in_dim, f32 accumulator scratch.
        TK = _pick_tile(Kp, (1024, 512, 256, 128))
        grid = (Np // TN, Bp // TM, Kp // TK)
        out_p = pl.pallas_call(
            _equal_linear_kernel_ktiled,
            out_shape=jax.ShapeDtypeStruct((Bp, Np), out_dtype),
            grid_spec=pltpu.PrefetchScalarGridSpec(
                num_scalar_prefetch=0,
                grid=grid,
                in_specs=[
                    pl.BlockSpec((TM, TK), lambda j, i, k: (i, k)),  # x tile
                    pl.BlockSpec((TN, TK), lambda j, i, k: (j, k)),  # W tile
                    pl.BlockSpec((1, TN), lambda j, i, k: (0, j)),   # bias tile
                ],
                out_specs=pl.BlockSpec((TM, TN), lambda j, i, k: (i, j)),
                scratch_shapes=[pltpu.VMEM((TM, TN), jnp.float32)],
            ),
            compiler_params=pltpu.CompilerParams(
                dimension_semantics=("parallel", "parallel", "arbitrary"),
            ),
            cost_estimate=cost,
        )(x_p, w_p, b_p)

    return out_p[:B, :out_dim]


# ----------------------------------------------------------------------------
# Self-test
# ----------------------------------------------------------------------------
def _reference(x, weight, bias):
    return (
        jax.lax.dot_general(
            x,
            weight,
            dimension_numbers=(((1,), (1,)), ((), ())),
            precision=jax.lax.Precision.HIGHEST,
        )
        + bias
    )


if __name__ == "__main__":
    key = jax.random.PRNGKey(0)
    k_x, k_w, k_x2, k_w2, k_b2 = jax.random.split(key, 5)

    # --- test 1: module-faithful small shapes (single-shot K path) -----------
    B, in_dim, out_dim = 8, 32, 32
    x = jax.random.normal(k_x, (B, in_dim), dtype=jnp.float32)
    bound = 1.0 / jnp.sqrt(in_dim)
    weight = jax.random.uniform(
        k_w, (out_dim, in_dim), dtype=jnp.float32, minval=-bound, maxval=bound
    )
    bias = jnp.zeros((out_dim,), dtype=jnp.float32)  # linear.bias.data.zero_()

    y = equal_linear(x, weight, bias)
    jax.block_until_ready(y)
    y_ref = _reference(x, weight, bias)
    assert y.shape == (B, out_dim)
    assert jnp.allclose(y, y_ref, atol=1e-4, rtol=1e-4)

    # --- test 2: unaligned dims + forced K-tiled path -------------------------
    B2, in2, out2 = 16, 200, 96
    x2 = jax.random.normal(k_x2, (B2, in2), dtype=jnp.float32)
    bound2 = 1.0 / jnp.sqrt(in2)
    w2 = jax.random.uniform(
        k_w2, (out2, in2), dtype=jnp.float32, minval=-bound2, maxval=bound2
    )
    b2 = 0.01 * jax.random.normal(k_b2, (out2,), dtype=jnp.float32)

    y2 = equal_linear(x2, w2, b2, max_single_k=128)  # Kp=256 -> 2 K steps
    jax.block_until_ready(y2)
    y2_ref = _reference(x2, w2, b2)
    assert y2.shape == (B2, out2)
    assert jnp.allclose(y2, y2_ref, atol=1e-4, rtol=1e-4)

    print("KERNEL_OK")
</pallas_src>

<mosaic_0001>
module attributes {stable_mosaic.version = 11 : i64} {
  func.func @_equal_linear_kernel(%arg0: i32, %arg1: i32, %arg2: memref<8x128xf32, #tpu.memory_space<vmem>>, %arg3: memref<128x128xf32, #tpu.memory_space<vmem>>, %arg4: memref<1x128xf32, #tpu.memory_space<vmem>>, %arg5: memref<8x128xf32, #tpu.memory_space<vmem>>) attributes {dimension_semantics = [#tpu.dimension_semantics<parallel>, #tpu.dimension_semantics<parallel>], iteration_bounds = array<i64: 1, 1>, scalar_prefetch = 0 : i64, scratch_operands = 0 : i64, tpu.core_type = #tpu.core_type<tc>, window_params = [{transform_indices = @transform_0, window_bounds = array<i64: 8, 128>}, {transform_indices = @transform_1, window_bounds = array<i64: 128, 128>}, {transform_indices = @transform_2, window_bounds = array<i64: 1, 128>}, {transform_indices = @transform_3, window_bounds = array<i64: 8, 128>}]} {
    %c0 = arith.constant 0 : index
    %c0_0 = arith.constant 0 : index
    %0 = vector.load %arg2[%c0, %c0_0] : memref<8x128xf32, #tpu.memory_space<vmem>>, vector<8x128xf32>
    %c0_1 = arith.constant 0 : index
    %c0_2 = arith.constant 0 : index
    %1 = vector.load %arg3[%c0_1, %c0_2] : memref<128x128xf32, #tpu.memory_space<vmem>>, vector<128x128xf32>
    %cst = arith.constant dense<0.000000e+00> : vector<8x128xf32>
    %2 = tpu.matmul %0, %1, %cst {dimension_numbers = #tpu.dot_dimension_numbers<[1], [1], [0], [0], [0, 0, 1, 0], [], []>} : vector<8x128xf32>, vector<128x128xf32>, vector<8x128xf32> -> vector<8x128xf32>
    %c0_3 = arith.constant 0 : index
    %c0_4 = arith.constant 0 : index
    %3 = vector.load %arg4[%c0_3, %c0_4] : memref<1x128xf32, #tpu.memory_space<vmem>>, vector<1x128xf32>
    %4 = vector.broadcast %3 : vector<1x128xf32> to vector<8x128xf32>
    %5 = arith.addf %2, %4 : vector<8x128xf32>
    %c0_5 = arith.constant 0 : index
    %c0_6 = arith.constant 0 : index
    %6 = vector.load %arg5[%c0_5, %c0_6] : memref<8x128xf32, #tpu.memory_space<vmem>>, vector<8x128xf32>
    tpu.vector_store %arg5[%c0_5, %c0_6], %5 {strides = array<i32>} : memref<8x128xf32, #tpu.memory_space<vmem>>, vector<8x128xf32>,
    return
  }
  func.func @transform_0(%arg0: i32, %arg1: i32) -> (i32, i32) {
    %c0_i32 = arith.constant 0 : i32
    %c0_i32_0 = arith.constant 0 : i32
    return %arg1, %c0_i32 : i32, i32
  }
  func.func @transform_1(%arg0: i32, %arg1: i32) -> (i32, i32) {
    %c0_i32 = arith.constant 0 : i32
    %c0_i32_0 = arith.constant 0 : i32
    return %arg0, %c0_i32 : i32, i32
  }
  func.func @transform_2(%arg0: i32, %arg1: i32) -> (i32, i32) {
    %c0_i32 = arith.constant 0 : i32
    %c0_i32_0 = arith.constant 0 : i32
    return %c0_i32, %arg0 : i32, i32
  }
  func.func @transform_3(%arg0: i32, %arg1: i32) -> (i32, i32) {
    %c0_i32 = arith.constant 0 : i32
    return %arg1, %arg0 : i32, i32
  }
}

</mosaic_0001>

<llo_original>
// kernel: equal_linear.1
$region0: #{equal_linear.1}
  #allocation0 [shape = 'u32[]', space=smem, size = 0x4, offset = 0x4, fixed_abs, tag = 'smem constant byte address 0x4 - core index']
  #allocation1 [shape = 'u32[144,128]{1,0:T(1,128)}', space=vmem, size = 0x12000, scoped, tag = 'internal scratch']
  %s0 = inlined_call_operand.vmem [shape: f32[8,128], index: 0, kind: input, shape index: {}]
  %s1 = inlined_call_operand.vmem [shape: f32[128,128], index: 1, kind: input, shape index: {}]
  %s2 = inlined_call_operand.vmem [shape: f32[1,128], index: 2, kind: input, shape index: {}]
  %s3 = inlined_call_operand.hbm [shape: f32[8,128], index: 3, kind: output, shape index: {}]
  %s4 = sld [smem:[#allocation0]]
  $region22: #{equal_linear.1} parent=0
    _
  %s6 = ssub.s32 1, %s4
  %s7 = scalar_select 0, %s6, %s4
  $region1: #{equal_linear.1} parent=0
    #allocation2 [shape = 'u8[4096]{0}', space=vmem, size = 0x1000, scoped, tag = 'output window, operand 0, single buffered']
    #allocation3 [shape = 's32[1]{0}', space=sflag, size = 0x4, scoped, tag = 'scoped memory for equal_linear.1']
    %8 = vsyncpa [#allocation3], 0
    // Predicated region
    $region2: #{equal_linear.1} parent=1 // pred_check
      _
    $region3: #{equal_linear.1} parent=1 // pred_check_branch
      %10 = sbr.rel (0) target = $region5
    $region4: #{equal_linear.1} parent=1 // pred_region
      _
    $region5: #{equal_linear.1} parent=1 // pred_fallthru
      _
    // Predicated region
    $region6: #{equal_linear.1} parent=1 // pred_check
      _
    $region7: #{equal_linear.1} parent=1 // pred_check_branch
      %12 = sbr.rel (0) target = $region9
    $region8: #{equal_linear.1} parent=1 // pred_region
      _
    $region9: #{equal_linear.1} parent=1 // pred_fallthru
      _
    // Predicated region
    $region10: #{equal_linear.1} parent=1 // pred_check
      _
    $region11: #{equal_linear.1} parent=1 // pred_check_branch
      %14 = sbr.rel (0) target = $region13
    $region12: #{equal_linear.1} parent=1 // pred_region
      _
    $region13: #{equal_linear.1} parent=1 // pred_fallthru
      _
    %v15 = vld [vmem:[%s0] sm:$0xff]
    %v16 = vld [vmem:[%s1] sm:$0xff]
    %v17 = vld [vmem:[%s1 + $0x8] sm:$0xff]
    %v18 = vld [vmem:[%s1 + $0x10] sm:$0xff]
    %v19 = vld [vmem:[%s1 + $0x18] sm:$0xff]
    %v20 = vld [vmem:[%s1 + $0x20] sm:$0xff]
    %v21 = vld [vmem:[%s1 + $0x28] sm:$0xff]
    %v22 = vld [vmem:[%s1 + $0x30] sm:$0xff]
    %v23 = vld [vmem:[%s1 + $0x38] sm:$0xff]
    %v24 = vld [vmem:[%s1 + $0x40] sm:$0xff]
    %v25 = vld [vmem:[%s1 + $0x48] sm:$0xff]
    %v26 = vld [vmem:[%s1 + $0x50] sm:$0xff]
    %v27 = vld [vmem:[%s1 + $0x58] sm:$0xff]
    %v28 = vld [vmem:[%s1 + $0x60] sm:$0xff]
    %v29 = vld [vmem:[%s1 + $0x68] sm:$0xff]
    %v30 = vld [vmem:[%s1 + $0x70] sm:$0xff]
    %v31 = vld [vmem:[%s1 + $0x78] sm:$0xff]
    %v32 = vld [vmem:[%s2] sm:$0x1]
    %v34 = vlaneseq
    %v35 = vshrl.u32 %v34, 7
    %v36 = vsub.s32 0, %v35
    %v37 = vrot.slane %v32, %v36
    %39 = vmatprep.subr.mxu0 0.0
    %40 = vmatpush1.xpose.msra.mxu0 %v16
    %41 = vmatprep.subr.mxu0 0.0
    %42 = vmatpush1.xpose.msra.mxu0 %v17
    %43 = vmatprep.subr.mxu0 0.0
    %44 = vmatpush1.xpose.msra.mxu0 %v18
    %45 = vmatprep.subr.mxu0 0.0
    %46 = vmatpush1.xpose.msra.mxu0 %v19
    %47 = vmatprep.subr.mxu0 0.0
    %48 = vmatpush1.xpose.msra.mxu0 %v20
    %49 = vmatprep.subr.mxu0 0.0
    %50 = vmatpush1.xpose.msra.mxu0 %v21
    %51 = vmatprep.subr.mxu0 0.0
    %52 = vmatpush1.xpose.msra.mxu0 %v22
    %53 = vmatprep.subr.mxu0 0.0
    %54 = vmatpush1.xpose.msra.mxu0 %v23
    %55 = vmatprep.subr.mxu0 0.0
    %56 = vmatpush1.xpose.msra.mxu0 %v24
    %57 = vmatprep.subr.mxu0 0.0
    %58 = vmatpush1.xpose.msra.mxu0 %v25
    %59 = vmatprep.subr.mxu0 0.0
    %60 = vmatpush1.xpose.msra.mxu0 %v26
    %61 = vmatprep.subr.mxu0 0.0
    %62 = vmatpush1.xpose.msra.mxu0 %v27
    %63 = vmatprep.subr.mxu0 0.0
    %64 = vmatpush1.xpose.msra.mxu0 %v28
    %65 = vmatprep.subr.mxu0 0.0
    %66 = vmatpush1.xpose.msra.mxu0 %v29
    %67 = vmatprep.subr.mxu0 0.0
    %68 = vmatpush1.xpose.msra.mxu0 %v30
    %69 = vmatprep.subr.mxu0 0.0
    %70 = vmatpush1.xpose.msra.mxu0 %v31
    %71 = vmatprep.subr.mxu0 0.0
    %72 = vmatpush1.xpose.msra.mxu0 0.0
    %73 = vmatprep.subr.mxu0 0.0
    %74 = vmatpush1.xpose.msra.mxu0 0.0
    %75 = vmatprep.subr.mxu0 0.0
    %76 = vmatpush1.xpose.msra.mxu0 0.0
    %77 = vmatprep.subr.mxu0 0.0
    %78 = vmatpush1.xpose.msra.mxu0 0.0
    %79 = vmatprep.subr.mxu0 0.0
    %80 = vmatpush1.xpose.msra.mxu0 0.0
    %81 = vmatprep.subr.mxu0 0.0
    %82 = vmatpush1.xpose.msra.mxu0 0.0
    %83 = vmatprep.subr.mxu0 0.0
    %84 = vmatpush1.xpose.msra.mxu0 0.0
    %85 = vmatprep.subr.mxu0 0.0
    %86 = vmatpush1.xpose.msra.mxu0 0.0
    %87 = vmatprep.subr.mxu0 0.0
    %88 = vmatpush1.xpose.msra.mxu0 0.0
    %89 = vmatprep.subr.mxu0 0.0
    %90 = vmatpush1.xpose.msra.mxu0 0.0
    %91 = vmatprep.subr.mxu0 0.0
    %92 = vmatpush1.xpose.msra.mxu0 0.0
    %93 = vmatprep.subr.mxu0 0.0
    %94 = vmatpush1.xpose.msra.mxu0 0.0
    %95 = vmatprep.subr.mxu0 0.0
    %96 = vmatpush1.xpose.msra.mxu0 0.0
    %97 = vmatprep.subr.mxu0 0.0
    %98 = vmatpush1.xpose.msra.mxu0 0.0
    %99 = vmatprep.subr.mxu0 0.0
    %100 = vmatpush1.xpose.msra.mxu0 0.0
    %101 = vmatprep.subr.mxu0 0.0
    %102 = vmatpush1.xpose.msra.mxu0 0.0
    %103 = vmatprep.mubr.f32.mxu0 0.0
    %104 = vmatmul.mubr.f32.gmra.mrb[0].mxu0 %v15
    %v105 = vpop.f32.mrb[0].mxu0
    %v106 = vadd.f32 %v37, %v105
    %v107 = vpop.f32.mrb[0].mxu0
    %108 = vdwg.mxu0
    %109 = vst [vmem:[#allocation2] sm:$0xff] %v106
    // Predicated region
    $region14: #{equal_linear.1} parent=1 // pred_check
      _
    $region15: #{equal_linear.1} parent=1 // pred_check_branch
      %111 = sbr.rel (0) target = $region17
    $region16: #{equal_linear.1} parent=1 // pred_region
      %s113 = ssub.s32 128, 128
      %114 = vsyncadd [#allocation3], %s113
      %s116 = sshll.u32 [#allocation2], 4
      %s117 = int_to_ptr.vmem [resolvable:$true] %s116
      %119 = dma.vmem_to_hbm [thread:$0]  %s117, 128, %s3, [#allocation3]
    $region17: #{equal_linear.1} parent=1 // pred_fallthru
      _
    // Predicated region
    $region18: #{equal_linear.1} parent=1 // pred_check
      _
    $region19: #{equal_linear.1} parent=1 // pred_check_branch
      %121 = sbr.rel (0) target = $region21
    $region20: #{equal_linear.1} parent=1 // pred_region
      %122 = dma.done [#allocation3], 128
    $region21: #{equal_linear.1} parent=1 // pred_fallthru
      _
    %123 = vsyncpa [#allocation3], 1

</llo_original>
